<compile_context>
chip_gen: v6e
topology: v6e:2x2x1
jax: 0.10.0
libtpu: 0.0.40
codegen_flags: <defaults>
</compile_context>

<pallas_src>
import jax
import jax.numpy as jnp
from jax.experimental import pallas as pl
from jax.experimental.pallas import tpu as pltpu


def _gated_activation_kernel(x_ref, o_ref):
    # x_ref: (2, tr, tc) -- slice [0] is the tanh half, [1] the gate half.
    x = x_ref[0].astype(jnp.float32)
    y = x_ref[1].astype(jnp.float32)
    # sigmoid(y) == 0.5 * (tanh(0.5*y) + 1): one EUP tanh, no exp + divide.
    gate = 0.5 * (jnp.tanh(0.5 * y) + 1.0)
    o_ref[...] = (jnp.tanh(x) * gate).astype(o_ref.dtype)


def _choose_tiles(rows: int, cols: int, itemsize: int):
    """Pick (row_tile, col_tile) for a (rows, cols) elementwise block.

    Targets ~1 MiB per output-block buffer (double-buffered x (2-wide input +
    output) ~= 6 MiB pipelined footprint).  Row tiles are multiples of the
    packed-sublane count (8 f32 / 16 bf16 / 32 int8) unless they span the full
    row extent; col tiles are multiples of 128 lanes unless full, so the
    (8, 128) layout rule always holds.  No divisor-of-shape requirement: the
    ragged tail block is masked by Pallas.
    """
    pack = 8 * max(1, 4 // itemsize)           # sublane rows per vreg
    budget_elems = (1 << 20) // itemsize       # ~1 MiB of elements per block

    # Lane (last-dim) tile.
    if cols <= 128 or cols * pack <= budget_elems:
        tc = cols                              # full extent: always legal
    else:
        tc = max(128, ((budget_elems // pack) // 128) * 128)
        tc = min(tc, (cols // 128) * 128)      # multiple of 128 lanes

    # Sublane (second-to-last dim) tile.
    max_rows = max(1, budget_elems // tc)
    if rows <= pack or rows <= max_rows:
        tr = rows                              # full extent: always legal
    else:
        tr = max(pack, (max_rows // pack) * pack)   # multiple of `pack`
    return tr, tc


def gated_activation(x: jax.Array) -> jax.Array:
    """x: (N, C, H, W), C even. Returns tanh(x[:, :C//2]) * sigmoid(x[:, C//2:])."""
    n, c, h, w = x.shape
    assert c % 2 == 0, "channel dim must be even for chunk(2, dim=1)"
    ch = c // 2
    half_len = ch * h * w
    itemsize = jnp.dtype(x.dtype).itemsize

    # Each chunk() half is contiguous, so these reshapes are free (no HBM copy).
    if half_len % 128 == 0:
        rows, cols = half_len // 128, 128      # lane-dense regardless of ch / H*W
    else:
        rows, cols = ch, h * w                 # fallback: full H*W on the lane axis
    x_view = x.reshape(n, 2, rows, cols)

    tr, tc = _choose_tiles(rows, cols, itemsize)
    grid = (n, pl.cdiv(rows, tr), pl.cdiv(cols, tc))

    total = n * half_len
    cost = pl.CostEstimate(
        flops=5 * total,                       # mul + tanh-identity scale/shift (approx)
        transcendentals=2 * total,             # two EUP tanh per output element
        bytes_accessed=3 * total * itemsize,   # read both halves + write one half
    )

    out = pl.pallas_call(
        _gated_activation_kernel,
        out_shape=jax.ShapeDtypeStruct((n, rows, cols), x.dtype),
        grid_spec=pltpu.PrefetchScalarGridSpec(
            num_scalar_prefetch=0,
            grid=grid,
            in_specs=[
                # One merged block carrying both halves: leading dim of size 2.
                pl.BlockSpec((None, 2, tr, tc), lambda i, j, k: (i, 0, j, k)),
            ],
            out_specs=pl.BlockSpec((None, tr, tc), lambda i, j, k: (i, j, k)),
        ),
        compiler_params=pltpu.CompilerParams(
            dimension_semantics=("parallel", "parallel", "parallel"),
            vmem_limit_bytes=32 * 1024 * 1024,
        ),
        cost_estimate=cost,
    )(x_view)

    return out.reshape(n, ch, h, w)


if __name__ == "__main__":
    key = jax.random.PRNGKey(0)
    # Small NCHW input: batch=2, channels=4 (chunk -> 2+2), spatial 16x16.
    x = jax.random.normal(key, (2, 4, 16, 16), dtype=jnp.float32)

    out = gated_activation(x)
    out = jax.block_until_ready(out)

    # Reference: plain JAX semantics of the PyTorch module.
    xh, yh = x[:, :2], x[:, 2:]
    ref = jnp.tanh(xh) * jax.nn.sigmoid(yh)
    assert out.shape == (2, 2, 16, 16)
    assert jnp.allclose(out, ref, atol=1e-5, rtol=1e-5), "mismatch vs reference"

    print("KERNEL_OK")
</pallas_src>

<mosaic_0001>
module attributes {stable_mosaic.version = 11 : i64} {
  func.func @_gated_activation_kernel(%arg0: i32, %arg1: i32, %arg2: i32, %arg3: memref<1x2x4x128xf32, #tpu.memory_space<vmem>>, %arg4: memref<1x4x128xf32, #tpu.memory_space<vmem>>) attributes {dimension_semantics = [#tpu.dimension_semantics<parallel>, #tpu.dimension_semantics<parallel>, #tpu.dimension_semantics<parallel>], iteration_bounds = array<i64: 2, 1, 1>, scalar_prefetch = 0 : i64, scratch_operands = 0 : i64, tpu.core_type = #tpu.core_type<tc>, window_params = [{transform_indices = @transform_0, window_bounds = array<i64: 1, 2, 4, 128>}, {transform_indices = @transform_1, window_bounds = array<i64: 1, 4, 128>}]} {
    %c0 = arith.constant 0 : index
    %c0_0 = arith.constant 0 : index
    %c0_1 = arith.constant 0 : index
    %c0_2 = arith.constant 0 : index
    %0 = vector.load %arg3[%c0, %c0_0, %c0_1, %c0_2] : memref<1x2x4x128xf32, #tpu.memory_space<vmem>>, vector<1x1x4x128xf32>
    %1 = vector.shape_cast %0 : vector<1x1x4x128xf32> to vector<4x128xf32>
    %c0_3 = arith.constant 0 : index
    %c1 = arith.constant 1 : index
    %c0_4 = arith.constant 0 : index
    %c0_5 = arith.constant 0 : index
    %2 = vector.load %arg3[%c0_3, %c1, %c0_4, %c0_5] : memref<1x2x4x128xf32, #tpu.memory_space<vmem>>, vector<1x1x4x128xf32>
    %3 = vector.shape_cast %2 : vector<1x1x4x128xf32> to vector<4x128xf32>
    %cst = arith.constant 5.000000e-01 : f32
    %4 = vector.broadcast %cst : f32 to vector<4x128xf32>
    %5 = arith.mulf %4, %3 : vector<4x128xf32>
    %6 = math.tanh %5 : vector<4x128xf32>
    %cst_6 = arith.constant 1.000000e+00 : f32
    %7 = vector.broadcast %cst_6 : f32 to vector<4x128xf32>
    %8 = arith.addf %6, %7 : vector<4x128xf32>
    %cst_7 = arith.constant 5.000000e-01 : f32
    %9 = vector.broadcast %cst_7 : f32 to vector<4x128xf32>
    %10 = arith.mulf %9, %8 : vector<4x128xf32>
    %11 = math.tanh %1 : vector<4x128xf32>
    %12 = arith.mulf %11, %10 : vector<4x128xf32>
    %c0_8 = arith.constant 0 : index
    %c0_9 = arith.constant 0 : index
    %c0_10 = arith.constant 0 : index
    %13 = vector.load %arg4[%c0_8, %c0_9, %c0_10] : memref<1x4x128xf32, #tpu.memory_space<vmem>>, vector<1x4x128xf32>
    %14 = vector.shape_cast %13 : vector<1x4x128xf32> to vector<4x128xf32>
    %15 = vector.shape_cast %12 : vector<4x128xf32> to vector<1x4x128xf32>
    tpu.vector_store %arg4[%c0_8, %c0_9, %c0_10], %15 {strides = array<i32>} : memref<1x4x128xf32, #tpu.memory_space<vmem>>, vector<1x4x128xf32>,
    return
  }
  func.func @transform_0(%arg0: i32, %arg1: i32, %arg2: i32) -> (i32, i32, i32, i32) {
    %c0_i32 = arith.constant 0 : i32
    %c0_i32_0 = arith.constant 0 : i32
    return %arg0, %c0_i32, %arg1, %arg2 : i32, i32, i32, i32
  }
  func.func @transform_1(%arg0: i32, %arg1: i32, %arg2: i32) -> (i32, i32, i32) {
    %c0_i32 = arith.constant 0 : i32
    return %arg0, %arg1, %arg2 : i32, i32, i32
  }
}

</mosaic_0001>

<llo_original>
// kernel: tpu_custom_call.1
$region0: #{tpu_custom_call.1}
  #allocation0 [shape = 'u32[]', space=smem, size = 0x4, offset = 0x4, fixed_abs, tag = 'smem constant byte address 0x4 - core index']
  #allocation1 [shape = 'u32[144,128]{1,0:T(1,128)}', space=vmem, size = 0x12000, scoped, tag = 'internal scratch']
  %s0 = inlined_call_operand.hbm [shape: f32[2,2,4,128], index: 0, kind: input, shape index: {}]
  %s1 = inlined_call_operand.hbm [shape: f32[2,4,128], index: 1, kind: output, shape index: {}]
  %s2 = sld [smem:[#allocation0]]
  $region41: #{tpu_custom_call.1} parent=0
    _
  %s4 = ssub.s32 1, %s2
  %s5 = scalar_select 0, %s4, %s2
  $region1: #{tpu_custom_call.1} parent=0
    #allocation2 [shape = 'u8[8192]{0}', space=vmem, size = 0x2000, scoped, tag = 'input window, operand 0']
    #allocation3 [shape = 's32[2]{0}', space=sflag, size = 0x8, scoped, tag = 'scoped memory for tpu_custom_call.1']
    #allocation4 [shape = 's32[2]{0}', space=sflag, size = 0x8, scoped, tag = 'scoped memory for tpu_custom_call.1']
    #allocation5 [shape = 'u8[4096]{0}', space=vmem, size = 0x1000, scoped, tag = 'output window, operand 0']
    %6 = vsyncpa [#allocation3], 0
    %s7 = scalar_lea.sflag [#allocation3], 1
    %8 = vsyncpa %s7, 0
    %9 = vsyncpa [#allocation4], 0
    %s10 = scalar_lea.sflag [#allocation4], 1
    %11 = vsyncpa %s10, 0
    loop: start=0, step=1, limit=4
    $region2: #{tpu_custom_call.1} parent=1 // loop_pre_header
      _
    $region3: #{tpu_custom_call.1} parent=1 // loop_header
      %s13 = sphi 0, %s17
      %p14 = scmp.ge.s32.totalorder %s13, 4
      %s20 = sphi 0, %s39
      %s21 = sphi 0, %s35
      %s22 = sphi 0, %s31
      %s23 = sphi 0, %s20
      %s24 = sphi 0, %s21
      %s25 = sphi 0, %s22
      %s26 = sphi 0, %s23
      %s27 = sphi 0, %s24
      %s28 = sphi 0, %s25
      %s46 = sphi 0, %s48
      %s49 = sphi 0, %s46
      %s50 = sphi 0, %s49
      %s66 = sphi 0, %s50
      %s76 = sphi 0, %s78
      %s79 = sphi 0, %s76
      %s80 = sphi 0, %s79
      %s96 = sphi 0, %s80
    $region4: #{tpu_custom_call.1} parent=1 // loop_header_branch
      %16 = sbr.rel (%p14) target = $region8
    $region5: #{tpu_custom_call.1} parent=1 // loop_body
      %s18 = ssub.s32 %s13, 1
      %s19 = ssub.s32 %s13, 2
      %s29 = sadd.s32 1, %s22
      %p30 = scmp.ge.s32.totalorder %s29, 1
      %s31 = scalar_select %p30, 0, %s29
      %s32 = sadd.s32 1, %s21
      %s33 = scalar_select %p30, %s32, %s21
      %p34 = scmp.ge.s32.totalorder %s33, 1
      %s35 = scalar_select %p34, 0, %s33
      %s36 = sadd.s32 1, %s20
      %s37 = scalar_select %p34, %s36, %s20
      %p38 = scmp.ge.s32.totalorder %s37, 2
      %s39 = scalar_select %p38, 0, %s37
      %s40 = ssub.s32 %s20, %s39
      %s41 = ssub.s32 %s21, %s35
      %s42 = sor.u32 %s40, %s41
      %s43 = ssub.s32 %s22, %s31
      %s44 = sor.u32 %s42, %s43
      %p45 = scmp.eq.s32.totalorder %s44, 0
      %s47 = sadd.s32 %s46, 1
      %s48 = scalar_select %p45, %s46, %s47
      %p51 = pneg %p45
      %p52 = scmp.eq.s32.totalorder %s13, 1
      %p53 = por %p51, %p52
      %p54 = scmp.ne.s32.totalorder %s46, %s49
      %p55 = scmp.eq.s32.totalorder %s13, 0
      %p56 = por %p54, %p55
      %p57 = scmp.ne.s32.totalorder %s46, %s49
      %p58 = scmp.eq.s32.totalorder %s18, 1
      %p59 = por %p57, %p58
      %p60 = scmp.ne.s32.totalorder %s49, %s50
      %p61 = scmp.eq.s32.totalorder %s18, 0
      %p62 = por %p60, %p61
      %p63 = scmp.ne.s32.totalorder %s49, %s50
      %p64 = scmp.eq.s32.totalorder %s19, 1
      %p65 = por %p63, %p64
      %p67 = scmp.ne.s32.totalorder %s50, %s66
      %p68 = scmp.eq.s32.totalorder %s19, 0
      %p69 = por %p67, %p68
      %s70 = ssub.s32 %s20, %s39
      %s71 = ssub.s32 %s21, %s35
      %s72 = sor.u32 %s70, %s71
      %s73 = ssub.s32 %s22, %s31
      %s74 = sor.u32 %s72, %s73
      %p75 = scmp.eq.s32.totalorder %s74, 0
      %s77 = sadd.s32 %s76, 1
      %s78 = scalar_select %p75, %s76, %s77
      %p81 = pneg %p75
      %p82 = scmp.eq.s32.totalorder %s13, 1
      %p83 = por %p81, %p82
      %p84 = scmp.ne.s32.totalorder %s76, %s79
      %p85 = scmp.eq.s32.totalorder %s13, 0
      %p86 = por %p84, %p85
      %p87 = scmp.ne.s32.totalorder %s76, %s79
      %p88 = scmp.eq.s32.totalorder %s18, 1
      %p89 = por %p87, %p88
      %p90 = scmp.ne.s32.totalorder %s79, %s80
      %p91 = scmp.eq.s32.totalorder %s18, 0
      %p92 = por %p90, %p91
      %p93 = scmp.ne.s32.totalorder %s79, %s80
      %p94 = scmp.eq.s32.totalorder %s19, 1
      %p95 = por %p93, %p94
      %p97 = scmp.ne.s32.totalorder %s80, %s96
      %p98 = scmp.eq.s32.totalorder %s19, 0
      %p99 = por %p97, %p98
      %p100 = scmp.le.s32.totalorder 1, %s13
      %p101 = scmp.lt.s32.totalorder %s13, 3
      %p102 = pnand %p100, %p101
      %p103 = pneg %p102
      // Predicated region
      $region9: #{tpu_custom_call.1} parent=5 // pred_check
        _
      $region10: #{tpu_custom_call.1} parent=5 // pred_check_branch
        %105 = sbr.rel (%p102) target = $region12
      $region11: #{tpu_custom_call.1} parent=5 // pred_region
        %s106 = ssub.s32 %s13, 1
      $region12: #{tpu_custom_call.1} parent=5 // pred_fallthru
        _
      %p107 = scmp.lt.s32.totalorder %s13, 2
      // Predicated region
      $region13: #{tpu_custom_call.1} parent=5 // pred_check
        %p108 = pneg %p107
      $region14: #{tpu_custom_call.1} parent=5 // pred_check_branch
        %110 = sbr.rel (%p108) target = $region16
      $region15: #{tpu_custom_call.1} parent=5 // pred_region
        // Predicated region
        $region17: #{tpu_custom_call.1} parent=15 // pred_check
          %p111 = pneg %p56
        $region18: #{tpu_custom_call.1} parent=15 // pred_check_branch
          %113 = sbr.rel (%p111) target = $region20
        $region19: #{tpu_custom_call.1} parent=15 // pred_region
          %s114 = sand.u32 %s46, 1
          %s115 = scalar_lea.sflag [#allocation3], %s114
          %s116 = sand.u32 %s46, 1
          %s117 = smul.addr %s116, 8
          %s118 = scalar_lea.vmem [#allocation2], %s117
          %s120 = ssub.s32 128, 128
          %121 = vsyncadd %s115, %s120
          %s122 = sadd.s32 %s22, %s21
          %s123 = smul.addr %s20, 2
          %s124 = sadd.s32 %s122, %s123
          %s125 = smul.addr %s124, 64
          %s126 = scalar_lea.hbm %s0, %s125
          %s127 = sshll.u32 %s118, 4
          %s128 = int_to_ptr.vmem [resolvable:$true] %s127
          %133 = dma.hbm_to_vmem [thread:$0]  %s126, 128, %s128, %s115, 64, 64, 4
        $region20: #{tpu_custom_call.1} parent=15 // pred_fallthru
          _
      $region16: #{tpu_custom_call.1} parent=5 // pred_fallthru
        _
      %p134 = scmp.le.s32.totalorder 1, %s13
      %p135 = scmp.lt.s32.totalorder %s13, 3
      %p136 = pnand %p134, %p135
      %p137 = pneg %p136
      // Predicated region
      $region21: #{tpu_custom_call.1} parent=5 // pred_check
        _
      $region22: #{tpu_custom_call.1} parent=5 // pred_check_branch
        %139 = sbr.rel (%p136) target = $region24
      $region23: #{tpu_custom_call.1} parent=5 // pred_region
        %s140 = ssub.s32 %s13, 1
        %s141 = sand.u32 %s49, 1
        %s142 = scalar_lea.sflag [#allocation3], %s141
        %s143 = sand.u32 %s49, 1
        %s144 = smul.addr %s143, 8
        %s145 = scalar_lea.vmem [#allocation2], %s144
        // Predicated region
        $region25: #{tpu_custom_call.1} parent=23 // pred_check
          %p146 = pneg %p62
        $region26: #{tpu_custom_call.1} parent=23 // pred_check_branch
          %148 = sbr.rel (%p146) target = $region28
        $region27: #{tpu_custom_call.1} parent=23 // pred_region
          %149 = dma.done %s142, 128
        $region28: #{tpu_custom_call.1} parent=23 // pred_fallthru
          _
        %s150 = sand.u32 %s49, 1
        %s151 = scalar_lea.sflag [#allocation3], %s150
        %s152 = sand.u32 %s49, 1
        %s153 = smul.addr %s152, 8
        %s154 = scalar_lea.vmem [#allocation2], %s153
        %p155 = pneg %p62
        %p156 = pneg %p59
        %p157 = pneg %p92
        %p158 = pneg %p89
        %s159 = sand.u32 %s79, 1
        %s160 = scalar_lea.sflag [#allocation4], %s159
        %s161 = sand.u32 %s79, 1
        %s162 = smul.addr %s161, 4
        %s163 = scalar_lea.vmem [#allocation5], %s162
        %v164 = vld [vmem:[%s145] sm:$0xf]
        %s165 = scalar_lea.vmem %s145, 4 [#allocation2]
        %v166 = vld [vmem:[%s165] sm:$0xf]
        %v167 = vmul.f32 %v166, 0.5
        %v168 = vtanh.pop %v167
        %v169 = vadd.f32 %v168, 1.0
        %v170 = vmul.f32 %v169, 0.5
        %v171 = vtanh.pop %v164
        %v172 = vmul.f32 %v171, %v170
        %173 = vst [vmem:[%s163] sm:$0xf] %v172
        %s174 = sand.u32 %s79, 1
        %s175 = scalar_lea.sflag [#allocation4], %s174
        %s176 = sand.u32 %s79, 1
        %s177 = smul.addr %s176, 4
        %s178 = scalar_lea.vmem [#allocation5], %s177
        // Predicated region
        $region29: #{tpu_custom_call.1} parent=23 // pred_check
          %p179 = pneg %p89
        $region30: #{tpu_custom_call.1} parent=23 // pred_check_branch
          %181 = sbr.rel (%p179) target = $region32
        $region31: #{tpu_custom_call.1} parent=23 // pred_region
          %s183 = ssub.s32 64, 64
          %184 = vsyncadd %s175, %s183
          %s185 = sadd.s32 %s25, %s24
          %s186 = sadd.s32 %s185, %s23
          %s187 = smul.addr %s186, 64
          %s188 = scalar_lea.hbm %s1, %s187
          %s190 = sshll.u32 %s178, 4
          %s191 = int_to_ptr.vmem [resolvable:$true] %s190
          %193 = dma.vmem_to_hbm [thread:$0]  %s191, 64, %s188, %s175
        $region32: #{tpu_custom_call.1} parent=23 // pred_fallthru
          _
      $region24: #{tpu_custom_call.1} parent=5 // pred_fallthru
        _
      %p194 = scmp.le.s32.totalorder 2, %s13
      // Predicated region
      $region33: #{tpu_custom_call.1} parent=5 // pred_check
        %p195 = pneg %p194
      $region34: #{tpu_custom_call.1} parent=5 // pred_check_branch
        %197 = sbr.rel (%p195) target = $region36
      $region35: #{tpu_custom_call.1} parent=5 // pred_region
        %s198 = ssub.s32 %s13, 2
        // Predicated region
        $region37: #{tpu_custom_call.1} parent=35 // pred_check
          %p199 = pneg %p95
        $region38: #{tpu_custom_call.1} parent=35 // pred_check_branch
          %201 = sbr.rel (%p199) target = $region40
        $region39: #{tpu_custom_call.1} parent=35 // pred_region
          %s202 = sand.u32 %s80, 1
          %s203 = scalar_lea.sflag [#allocation4], %s202
          %s204 = sand.u32 %s80, 1
          %s205 = smul.addr %s204, 4
          %s206 = scalar_lea.vmem [#allocation5], %s205
          %207 = dma.done %s203, 64
        $region40: #{tpu_custom_call.1} parent=35 // pred_fallthru
          _
      $region36: #{tpu_custom_call.1} parent=5 // pred_fallthru
        _
    $region6: #{tpu_custom_call.1} parent=1 // loop_footer
      %s17 = sadd.s32 1, %s13
    $region7: #{tpu_custom_call.1} parent=1 // loop_footer_branch
      %12 = sbr.rel target = $region3
    $region8: #{tpu_custom_call.1} parent=1 // loop_exit
      _
    %208 = vsyncpa [#allocation3], 1
    %s209 = scalar_lea.sflag [#allocation3], 1
    %210 = vsyncpa %s209, 1
    %211 = vsyncpa [#allocation4], 1
    %s212 = scalar_lea.sflag [#allocation4], 1
    %213 = vsyncpa %s212, 1

</llo_original>
